<compile_context>
chip_gen: v5e
topology: v5e:2x2
jax: 0.10.0
libtpu: 0.0.40
codegen_flags: <defaults>
</compile_context>

<pallas_src>
import functools

import jax
import jax.numpy as jnp
from jax.experimental import pallas as pl
from jax.experimental.pallas import tpu as pltpu


def _round_up(x, m):
    return (x + m - 1) // m * m


def _default_elementwise_dtype():
    """bf16 bias/ReLU chain on chips with a bf16 VPU (v6e/v7x), f32 otherwise."""
    try:
        kind = jax.devices()[0].device_kind.lower()
    except Exception:
        kind = ""
    if any(s in kind for s in ("v2", "v3", "v4", "v5")):
        return jnp.float32
    return jnp.bfloat16


def _choose_tile(batch, tile_b):
    """Batch tile: big to amortize per-step overhead, but >=2 tiles when batch
    is large so the 'parallel' axis can shard across v7x's two TensorCores."""
    if batch <= 256:
        return _round_up(batch, 8)            # single small tile
    half = _round_up((batch + 1) // 2, 128)   # at least two grid steps
    return max(128, min(_round_up(tile_b, 128), half))


def contrastive_head_kernel(img_ref, emo_ref, exp_ref,
                            w1i_ref, w1e_ref, w1x_ref, b1_ref,
                            w2_ref, b2_ref, w3_ref, b3_ref, w4_ref, b4_ref,
                            w5_ref, b5_ref, out_ref, *, ew_dtype):
    f32 = jnp.float32
    cd = w2_ref.dtype  # MXU operand dtype (bf16)

    # Layer 1: three partial matmuls over the [img | emo | exp] split of W1,
    # accumulated in f32 (replaces the wrapper-side concat — no extra HBM pass).
    acc = jnp.dot(img_ref[...].astype(cd), w1i_ref[...], preferred_element_type=f32)
    acc = acc + jnp.dot(emo_ref[...].astype(cd), w1e_ref[...], preferred_element_type=f32)
    acc = acc + jnp.dot(exp_ref[...].astype(cd), w1x_ref[...], preferred_element_type=f32)
    h = jnp.maximum(acc.astype(ew_dtype) + b1_ref[...], 0).astype(cd)

    # Hidden layers 2..4: bf16 MXU operands, f32 accumulate, elementwise in ew_dtype.
    for w_ref, b_ref in ((w2_ref, b2_ref), (w3_ref, b3_ref), (w4_ref, b4_ref)):
        acc = jnp.dot(h, w_ref[...], preferred_element_type=f32)
        h = jnp.maximum(acc.astype(ew_dtype) + b_ref[...], 0).astype(cd)

    # Final Linear(H, 1): plain (tb, H) @ (H, 1) -> (tb, 1) column; scalar bias from SMEM.
    col = jnp.dot(h, w5_ref[...], preferred_element_type=f32)
    out_ref[...] = col + b5_ref[0]


def contrastive_head_forward(img, emo, exp, params, *, tile_b=4096,
                             compute_dtype=jnp.bfloat16, elementwise_dtype=None,
                             use_pallas=None):
    """Pallas-backed forward of ContrastiveHead. Returns (out, info)."""
    w1, b1, w2, b2, w3, b3, w4, b4, w5, b5 = params
    B, d_im = img.shape
    d_lang = emo.shape[-1]
    assert exp.shape[-1] == d_lang and w1.shape[0] == d_im + 2 * d_lang

    ed = elementwise_dtype if elementwise_dtype is not None else _default_elementwise_dtype()
    cd = compute_dtype

    if use_pallas is None:
        use_pallas = B >= 256   # tiny batches: XLA's fused small-GEMM path wins
    if not use_pallas:
        return reference_forward(img, emo, exp, params, compute_dtype=cd,
                                 elementwise_dtype=ed), {}

    tb = _choose_tile(B, tile_b)
    b_pad = _round_up(B, tb)
    n_tiles = b_pad // tb
    if b_pad != B:
        pad = ((0, b_pad - B), (0, 0))
        img = jnp.pad(img, pad)
        emo = jnp.pad(emo, pad)
        exp = jnp.pad(exp, pad)

    # Split W1 rows by input source; weights in bf16 (MXU), biases in ew dtype.
    w1i = w1[:d_im].astype(cd)
    w1e = w1[d_im:d_im + d_lang].astype(cd)
    w1x = w1[d_im + d_lang:].astype(cd)
    w2c, w3c, w4c = (w.astype(cd) for w in (w2, w3, w4))
    w5c = w5.astype(cd)                                   # (H, 1)
    b1e, b2e, b3e, b4e = (b.astype(ed) for b in (b1, b2, b3, b4))
    b5f = jnp.asarray(b5, jnp.float32).reshape(1)         # scalar -> 1-D SMEM

    def resident(a):  # whole-array block, constant index map -> stays in VMEM
        nd = a.ndim
        return pl.BlockSpec(a.shape, lambda i, _nd=nd: (0,) * _nd)

    out = pl.pallas_call(
        functools.partial(contrastive_head_kernel, ew_dtype=ed),
        out_shape=jax.ShapeDtypeStruct((b_pad, 1), jnp.float32),
        grid=(n_tiles,),
        in_specs=[
            pl.BlockSpec((tb, d_im), lambda i: (i, 0)),    # img: batch-tiled
            pl.BlockSpec((tb, d_lang), lambda i: (i, 0)),  # emo: batch-tiled
            pl.BlockSpec((tb, d_lang), lambda i: (i, 0)),  # exp: batch-tiled
            resident(w1i), resident(w1e), resident(w1x), resident(b1e),
            resident(w2c), resident(b2e),
            resident(w3c), resident(b3e),
            resident(w4c), resident(b4e),
            resident(w5c),
            pl.BlockSpec(memory_space=pltpu.MemorySpace.SMEM),  # b5 scalar (1,)
        ],
        out_specs=pl.BlockSpec((tb, 1), lambda i: (i, 0)),
        compiler_params=pltpu.CompilerParams(
            dimension_semantics=("parallel",),   # shards tiles across v7x's 2 TCs
            vmem_limit_bytes=32 * 1024 * 1024,
        ),
    )(img, emo, exp, w1i, w1e, w1x, b1e, w2c, b2e, w3c, b3e, w4c, b4e, w5c, b5f)

    # torch .squeeze(): drop the size-1 dim; also drop batch padding.
    return out.reshape(b_pad)[:B], {}


def init_params(key, im_dim, hidden_dim, lang_dim):
    """Deterministic synthetic weights matching the nn.Sequential shapes.
    Weights stored pre-transposed as (in_features, out_features)."""
    d_in = lang_dim * 2 + im_dim
    ks = jax.random.split(key, 10)
    s = 0.1
    w1 = jax.random.normal(ks[0], (d_in, hidden_dim), jnp.float32) * s
    b1 = jax.random.normal(ks[1], (1, hidden_dim), jnp.float32) * s
    w2 = jax.random.normal(ks[2], (hidden_dim, hidden_dim), jnp.float32) * s
    b2 = jax.random.normal(ks[3], (1, hidden_dim), jnp.float32) * s
    w3 = jax.random.normal(ks[4], (hidden_dim, hidden_dim), jnp.float32) * s
    b3 = jax.random.normal(ks[5], (1, hidden_dim), jnp.float32) * s
    w4 = jax.random.normal(ks[6], (hidden_dim, hidden_dim), jnp.float32) * s
    b4 = jax.random.normal(ks[7], (1, hidden_dim), jnp.float32) * s
    w5 = jax.random.normal(ks[8], (hidden_dim, 1), jnp.float32) * s   # Linear(H,1) as (H,1)
    b5 = jax.random.normal(ks[9], (1,), jnp.float32) * s
    return (w1, b1, w2, b2, w3, b3, w4, b4, w5, b5)


def reference_forward(img, emo, exp, params, compute_dtype=jnp.bfloat16,
                      elementwise_dtype=None):
    """Pure-JAX reference mirroring the kernel math (bf16 MXU operands, f32
    accumulate, elementwise chain in `elementwise_dtype`)."""
    w1, b1, w2, b2, w3, b3, w4, b4, w5, b5 = params
    cd = compute_dtype
    ed = elementwise_dtype if elementwise_dtype is not None else _default_elementwise_dtype()
    x = jnp.concatenate([img, emo, exp], axis=-1)

    def layer(h, w, b):
        acc = jnp.dot(h.astype(cd), w.astype(cd), preferred_element_type=jnp.float32)
        return jnp.maximum(acc.astype(ed) + b.astype(ed), 0).astype(cd)

    h = layer(x, w1, b1)
    h = layer(h, w2, b2)
    h = layer(h, w3, b3)
    h = layer(h, w4, b4)
    out = jnp.dot(h, w5.astype(cd), preferred_element_type=jnp.float32) + b5.reshape(())
    return jnp.squeeze(out, axis=-1).astype(jnp.float32)


if __name__ == "__main__":
    im_dim, hidden_dim, lang_dim = 32, 32, 16

    key = jax.random.PRNGKey(0)
    k_data, k_params = jax.random.split(key)
    params = init_params(k_params, im_dim, hidden_dim, lang_dim)

    # Two cases: B=8 (single small tile, padding) and B=300 (padding + 2 tiles
    # so the parallel grid axis / multi-tile path is exercised).
    for batch in (8, 300):
        ki, ke, kx = jax.random.split(jax.random.fold_in(k_data, batch), 3)
        img = jax.random.normal(ki, (batch, im_dim), jnp.float32)
        emo = jax.random.normal(ke, (batch, lang_dim), jnp.float32)
        exp = jax.random.normal(kx, (batch, lang_dim), jnp.float32)

        out, info = contrastive_head_forward(img, emo, exp, params,
                                             tile_b=256, use_pallas=True)
        out = jax.block_until_ready(out)

        ref = reference_forward(img, emo, exp, params)
        assert out.shape == (batch,), (out.shape, batch)
        assert jnp.allclose(out, ref, atol=5e-3, rtol=5e-3), (batch, out, ref)

    print("KERNEL_OK")
</pallas_src>

<mosaic_0001>
module attributes {stable_mosaic.version = 11 : i64} {
  func.func @contrastive_head_kernel(%arg0: i32, %arg1: memref<8x32xf32, #tpu.memory_space<vmem>>, %arg2: memref<8x16xf32, #tpu.memory_space<vmem>>, %arg3: memref<8x16xf32, #tpu.memory_space<vmem>>, %arg4: memref<32x32xbf16, #tpu.memory_space<vmem>>, %arg5: memref<16x32xbf16, #tpu.memory_space<vmem>>, %arg6: memref<16x32xbf16, #tpu.memory_space<vmem>>, %arg7: memref<1x32xbf16, #tpu.memory_space<vmem>>, %arg8: memref<32x32xbf16, #tpu.memory_space<vmem>>, %arg9: memref<1x32xbf16, #tpu.memory_space<vmem>>, %arg10: memref<32x32xbf16, #tpu.memory_space<vmem>>, %arg11: memref<1x32xbf16, #tpu.memory_space<vmem>>, %arg12: memref<32x32xbf16, #tpu.memory_space<vmem>>, %arg13: memref<1x32xbf16, #tpu.memory_space<vmem>>, %arg14: memref<32x1xbf16, #tpu.memory_space<vmem>>, %arg15: memref<1xf32, #tpu.memory_space<smem>>, %arg16: memref<8x1xf32, #tpu.memory_space<vmem>>) attributes {dimension_semantics = [#tpu.dimension_semantics<parallel>], iteration_bounds = array<i64: 1>, scalar_prefetch = 0 : i64, scratch_operands = 0 : i64, tpu.core_type = #tpu.core_type<tc>, window_params = [{transform_indices = @transform_0, window_bounds = array<i64: 8, 32>}, {transform_indices = @transform_1, window_bounds = array<i64: 8, 16>}, {transform_indices = @transform_2, window_bounds = array<i64: 8, 16>}, {pipeline_mode = #tpu.pipeline_mode<synchronous>, transform_indices = @transform_3, window_bounds = array<i64: 32, 32>}, {pipeline_mode = #tpu.pipeline_mode<synchronous>, transform_indices = @transform_4, window_bounds = array<i64: 16, 32>}, {pipeline_mode = #tpu.pipeline_mode<synchronous>, transform_indices = @transform_5, window_bounds = array<i64: 16, 32>}, {pipeline_mode = #tpu.pipeline_mode<synchronous>, transform_indices = @transform_6, window_bounds = array<i64: 1, 32>}, {pipeline_mode = #tpu.pipeline_mode<synchronous>, transform_indices = @transform_7, window_bounds = array<i64: 32, 32>}, {pipeline_mode = #tpu.pipeline_mode<synchronous>, transform_indices = @transform_8, window_bounds = array<i64: 1, 32>}, {pipeline_mode = #tpu.pipeline_mode<synchronous>, transform_indices = @transform_9, window_bounds = array<i64: 32, 32>}, {pipeline_mode = #tpu.pipeline_mode<synchronous>, transform_indices = @transform_10, window_bounds = array<i64: 1, 32>}, {pipeline_mode = #tpu.pipeline_mode<synchronous>, transform_indices = @transform_11, window_bounds = array<i64: 32, 32>}, {pipeline_mode = #tpu.pipeline_mode<synchronous>, transform_indices = @transform_12, window_bounds = array<i64: 1, 32>}, {pipeline_mode = #tpu.pipeline_mode<synchronous>, transform_indices = @transform_13, window_bounds = array<i64: 32, 1>}, {transform_indices = @transform_14, window_bounds = array<i64: 1>}, {transform_indices = @transform_15, window_bounds = array<i64: 8, 1>}]} {
    %c0 = arith.constant 0 : index
    %c0_0 = arith.constant 0 : index
    %0 = vector.load %arg1[%c0, %c0_0] : memref<8x32xf32, #tpu.memory_space<vmem>>, vector<8x32xf32>
    %1 = arith.truncf %0 : vector<8x32xf32> to vector<8x32xbf16>
    %c0_1 = arith.constant 0 : index
    %c0_2 = arith.constant 0 : index
    %2 = vector.load %arg4[%c0_1, %c0_2] : memref<32x32xbf16, #tpu.memory_space<vmem>>, vector<32x32xbf16>
    %cst = arith.constant dense<0.000000e+00> : vector<8x32xf32>
    %3 = tpu.matmul %1, %2, %cst {dimension_numbers = #tpu.dot_dimension_numbers<[1], [0], [0], [1], [0, 0, 1, 1], [], []>} : vector<8x32xbf16>, vector<32x32xbf16>, vector<8x32xf32> -> vector<8x32xf32>
    %c0_3 = arith.constant 0 : index
    %c0_4 = arith.constant 0 : index
    %4 = vector.load %arg2[%c0_3, %c0_4] : memref<8x16xf32, #tpu.memory_space<vmem>>, vector<8x16xf32>
    %5 = arith.truncf %4 : vector<8x16xf32> to vector<8x16xbf16>
    %c0_5 = arith.constant 0 : index
    %c0_6 = arith.constant 0 : index
    %6 = vector.load %arg5[%c0_5, %c0_6] : memref<16x32xbf16, #tpu.memory_space<vmem>>, vector<16x32xbf16>
    %cst_7 = arith.constant dense<0.000000e+00> : vector<8x32xf32>
    %7 = tpu.matmul %5, %6, %cst_7 {dimension_numbers = #tpu.dot_dimension_numbers<[1], [0], [0], [1], [0, 0, 1, 1], [], []>} : vector<8x16xbf16>, vector<16x32xbf16>, vector<8x32xf32> -> vector<8x32xf32>
    %8 = arith.addf %3, %7 : vector<8x32xf32>
    %c0_8 = arith.constant 0 : index
    %c0_9 = arith.constant 0 : index
    %9 = vector.load %arg3[%c0_8, %c0_9] : memref<8x16xf32, #tpu.memory_space<vmem>>, vector<8x16xf32>
    %10 = arith.truncf %9 : vector<8x16xf32> to vector<8x16xbf16>
    %c0_10 = arith.constant 0 : index
    %c0_11 = arith.constant 0 : index
    %11 = vector.load %arg6[%c0_10, %c0_11] : memref<16x32xbf16, #tpu.memory_space<vmem>>, vector<16x32xbf16>
    %cst_12 = arith.constant dense<0.000000e+00> : vector<8x32xf32>
    %12 = tpu.matmul %10, %11, %cst_12 {dimension_numbers = #tpu.dot_dimension_numbers<[1], [0], [0], [1], [0, 0, 1, 1], [], []>} : vector<8x16xbf16>, vector<16x32xbf16>, vector<8x32xf32> -> vector<8x32xf32>
    %13 = arith.addf %8, %12 : vector<8x32xf32>
    %14 = arith.truncf %13 : vector<8x32xf32> to vector<8x32xbf16>
    %c0_13 = arith.constant 0 : index
    %c0_14 = arith.constant 0 : index
    %15 = vector.load %arg7[%c0_13, %c0_14] : memref<1x32xbf16, #tpu.memory_space<vmem>>, vector<1x32xbf16>
    %16 = vector.broadcast %15 : vector<1x32xbf16> to vector<8x32xbf16>
    %17 = arith.addf %14, %16 : vector<8x32xbf16>
    %cst_15 = arith.constant 0.000000e+00 : bf16
    %18 = vector.broadcast %cst_15 : bf16 to vector<8x32xbf16>
    %19 = arith.maximumf %17, %18 : vector<8x32xbf16>
    %c0_16 = arith.constant 0 : index
    %c0_17 = arith.constant 0 : index
    %20 = vector.load %arg8[%c0_16, %c0_17] : memref<32x32xbf16, #tpu.memory_space<vmem>>, vector<32x32xbf16>
    %cst_18 = arith.constant dense<0.000000e+00> : vector<8x32xf32>
    %21 = tpu.matmul %19, %20, %cst_18 {dimension_numbers = #tpu.dot_dimension_numbers<[1], [0], [0], [1], [0, 0, 1, 1], [], []>} : vector<8x32xbf16>, vector<32x32xbf16>, vector<8x32xf32> -> vector<8x32xf32>
    %22 = arith.truncf %21 : vector<8x32xf32> to vector<8x32xbf16>
    %c0_19 = arith.constant 0 : index
    %c0_20 = arith.constant 0 : index
    %23 = vector.load %arg9[%c0_19, %c0_20] : memref<1x32xbf16, #tpu.memory_space<vmem>>, vector<1x32xbf16>
    %24 = vector.broadcast %23 : vector<1x32xbf16> to vector<8x32xbf16>
    %25 = arith.addf %22, %24 : vector<8x32xbf16>
    %cst_21 = arith.constant 0.000000e+00 : bf16
    %26 = vector.broadcast %cst_21 : bf16 to vector<8x32xbf16>
    %27 = arith.maximumf %25, %26 : vector<8x32xbf16>
    %c0_22 = arith.constant 0 : index
    %c0_23 = arith.constant 0 : index
    %28 = vector.load %arg10[%c0_22, %c0_23] : memref<32x32xbf16, #tpu.memory_space<vmem>>, vector<32x32xbf16>
    %cst_24 = arith.constant dense<0.000000e+00> : vector<8x32xf32>
    %29 = tpu.matmul %27, %28, %cst_24 {dimension_numbers = #tpu.dot_dimension_numbers<[1], [0], [0], [1], [0, 0, 1, 1], [], []>} : vector<8x32xbf16>, vector<32x32xbf16>, vector<8x32xf32> -> vector<8x32xf32>
    %30 = arith.truncf %29 : vector<8x32xf32> to vector<8x32xbf16>
    %c0_25 = arith.constant 0 : index
    %c0_26 = arith.constant 0 : index
    %31 = vector.load %arg11[%c0_25, %c0_26] : memref<1x32xbf16, #tpu.memory_space<vmem>>, vector<1x32xbf16>
    %32 = vector.broadcast %31 : vector<1x32xbf16> to vector<8x32xbf16>
    %33 = arith.addf %30, %32 : vector<8x32xbf16>
    %cst_27 = arith.constant 0.000000e+00 : bf16
    %34 = vector.broadcast %cst_27 : bf16 to vector<8x32xbf16>
    %35 = arith.maximumf %33, %34 : vector<8x32xbf16>
    %c0_28 = arith.constant 0 : index
    %c0_29 = arith.constant 0 : index
    %36 = vector.load %arg12[%c0_28, %c0_29] : memref<32x32xbf16, #tpu.memory_space<vmem>>, vector<32x32xbf16>
    %cst_30 = arith.constant dense<0.000000e+00> : vector<8x32xf32>
    %37 = tpu.matmul %35, %36, %cst_30 {dimension_numbers = #tpu.dot_dimension_numbers<[1], [0], [0], [1], [0, 0, 1, 1], [], []>} : vector<8x32xbf16>, vector<32x32xbf16>, vector<8x32xf32> -> vector<8x32xf32>
    %38 = arith.truncf %37 : vector<8x32xf32> to vector<8x32xbf16>
    %c0_31 = arith.constant 0 : index
    %c0_32 = arith.constant 0 : index
    %39 = vector.load %arg13[%c0_31, %c0_32] : memref<1x32xbf16, #tpu.memory_space<vmem>>, vector<1x32xbf16>
    %40 = vector.broadcast %39 : vector<1x32xbf16> to vector<8x32xbf16>
    %41 = arith.addf %38, %40 : vector<8x32xbf16>
    %cst_33 = arith.constant 0.000000e+00 : bf16
    %42 = vector.broadcast %cst_33 : bf16 to vector<8x32xbf16>
    %43 = arith.maximumf %41, %42 : vector<8x32xbf16>
    %c0_34 = arith.constant 0 : index
    %c0_35 = arith.constant 0 : index
    %44 = vector.load %arg14[%c0_34, %c0_35] : memref<32x1xbf16, #tpu.memory_space<vmem>>, vector<32x1xbf16>
    %cst_36 = arith.constant dense<0.000000e+00> : vector<8x1xf32>
    %45 = tpu.matmul %43, %44, %cst_36 {dimension_numbers = #tpu.dot_dimension_numbers<[1], [0], [0], [1], [0, 0, 1, 1], [], []>} : vector<8x32xbf16>, vector<32x1xbf16>, vector<8x1xf32> -> vector<8x1xf32>
    %c0_37 = arith.constant 0 : index
    %46 = memref.load %arg15[%c0_37] : memref<1xf32, #tpu.memory_space<smem>>
    %47 = vector.broadcast %46 : f32 to vector<8x1xf32>
    %48 = arith.addf %45, %47 : vector<8x1xf32>
    %c0_38 = arith.constant 0 : index
    %c0_39 = arith.constant 0 : index
    %49 = vector.load %arg16[%c0_38, %c0_39] : memref<8x1xf32, #tpu.memory_space<vmem>>, vector<8x1xf32>
    tpu.vector_store %arg16[%c0_38, %c0_39], %48 {strides = array<i32>} : memref<8x1xf32, #tpu.memory_space<vmem>>, vector<8x1xf32>,
    return
  }
  func.func @transform_0(%arg0: i32) -> (i32, i32) {
    %c0_i32 = arith.constant 0 : i32
    %c0_i32_0 = arith.constant 0 : i32
    return %arg0, %c0_i32 : i32, i32
  }
  func.func @transform_1(%arg0: i32) -> (i32, i32) {
    %c0_i32 = arith.constant 0 : i32
    %c0_i32_0 = arith.constant 0 : i32
    return %arg0, %c0_i32 : i32, i32
  }
  func.func @transform_2(%arg0: i32) -> (i32, i32) {
    %c0_i32 = arith.constant 0 : i32
    %c0_i32_0 = arith.constant 0 : i32
    return %arg0, %c0_i32 : i32, i32
  }
  func.func @transform_3(%arg0: i32) -> (i32, i32) {
    %c0_i32 = arith.constant 0 : i32
    %c0_i32_0 = arith.constant 0 : i32
    %c0_i32_1 = arith.constant 0 : i32
    return %c0_i32, %c0_i32_0 : i32, i32
  }
  func.func @transform_4(%arg0: i32) -> (i32, i32) {
    %c0_i32 = arith.constant 0 : i32
    %c0_i32_0 = arith.constant 0 : i32
    %c0_i32_1 = arith.constant 0 : i32
    return %c0_i32, %c0_i32_0 : i32, i32
  }
  func.func @transform_5(%arg0: i32) -> (i32, i32) {
    %c0_i32 = arith.constant 0 : i32
    %c0_i32_0 = arith.constant 0 : i32
    %c0_i32_1 = arith.constant 0 : i32
    return %c0_i32, %c0_i32_0 : i32, i32
  }
  func.func @transform_6(%arg0: i32) -> (i32, i32) {
    %c0_i32 = arith.constant 0 : i32
    %c0_i32_0 = arith.constant 0 : i32
    %c0_i32_1 = arith.constant 0 : i32
    return %c0_i32, %c0_i32_0 : i32, i32
  }
  func.func @transform_7(%arg0: i32) -> (i32, i32) {
    %c0_i32 = arith.constant 0 : i32
    %c0_i32_0 = arith.constant 0 : i32
    %c0_i32_1 = arith.constant 0 : i32
    return %c0_i32, %c0_i32_0 : i32, i32
  }
  func.func @transform_8(%arg0: i32) -> (i32, i32) {
    %c0_i32 = arith.constant 0 : i32
    %c0_i32_0 = arith.constant 0 : i32
    %c0_i32_1 = arith.constant 0 : i32
    return %c0_i32, %c0_i32_0 : i32, i32
  }
  func.func @transform_9(%arg0: i32) -> (i32, i32) {
    %c0_i32 = arith.constant 0 : i32
    %c0_i32_0 = arith.constant 0 : i32
    %c0_i32_1 = arith.constant 0 : i32
    return %c0_i32, %c0_i32_0 : i32, i32
  }
  func.func @transform_10(%arg0: i32) -> (i32, i32) {
    %c0_i32 = arith.constant 0 : i32
    %c0_i32_0 = arith.constant 0 : i32
    %c0_i32_1 = arith.constant 0 : i32
    return %c0_i32, %c0_i32_0 : i32, i32
  }
  func.func @transform_11(%arg0: i32) -> (i32, i32) {
    %c0_i32 = arith.constant 0 : i32
    %c0_i32_0 = arith.constant 0 : i32
    %c0_i32_1 = arith.constant 0 : i32
    return %c0_i32, %c0_i32_0 : i32, i32
  }
  func.func @transform_12(%arg0: i32) -> (i32, i32) {
    %c0_i32 = arith.constant 0 : i32
    %c0_i32_0 = arith.constant 0 : i32
    %c0_i32_1 = arith.constant 0 : i32
    return %c0_i32, %c0_i32_0 : i32, i32
  }
  func.func @transform_13(%arg0: i32) -> (i32, i32) {
    %c0_i32 = arith.constant 0 : i32
    %c0_i32_0 = arith.constant 0 : i32
    %c0_i32_1 = arith.constant 0 : i32
    return %c0_i32, %c0_i32_0 : i32, i32
  }
  func.func @transform_14(%arg0: i32) -> i32 {
    %c0_i32 = arith.constant 0 : i32
    %c0_i32_0 = arith.constant 0 : i32
    return %c0_i32 : i32
  }
  func.func @transform_15(%arg0: i32) -> (i32, i32) {
    %c0_i32 = arith.constant 0 : i32
    %c0_i32_0 = arith.constant 0 : i32
    return %arg0, %c0_i32 : i32, i32
  }
}

</mosaic_0001>

<llo_original>
// kernel: tpu_custom_call.1
$region0: #{tpu_custom_call.1}
  #allocation0 [shape = 'u32[]', space=smem, size = 0x4, offset = 0x4, fixed_abs, tag = 'smem constant byte address 0x4 - core index']
  #allocation1 [shape = 'u32[72,128]{1,0:T(1,128)}', space=vmem, size = 0x9000, scoped, tag = 'internal scratch']
  #allocation2 [shape = 'f32[1]{0:T(128)S(6)}', space=smem, size = 0x200, scoped, tag = 'scoped memory for tpu_custom_call.1']
  %s0 = inlined_call_operand.hbm [shape: f32[8,32], index: 0, kind: input, shape index: {}]
  %s1 = inlined_call_operand.hbm [shape: f32[8,16], index: 1, kind: input, shape index: {}]
  %s2 = inlined_call_operand.hbm [shape: f32[8,16], index: 2, kind: input, shape index: {}]
  %s3 = inlined_call_operand.vmem [shape: bf16[32,32], index: 3, kind: input, shape index: {}]
  %s4 = inlined_call_operand.hbm [shape: bf16[16,32], index: 4, kind: input, shape index: {}]
  %s5 = inlined_call_operand.hbm [shape: bf16[16,32], index: 5, kind: input, shape index: {}]
  %s6 = inlined_call_operand.vmem [shape: bf16[1,32], index: 6, kind: input, shape index: {}]
  %s7 = inlined_call_operand.hbm [shape: bf16[32,32], index: 7, kind: input, shape index: {}]
  %s8 = inlined_call_operand.vmem [shape: bf16[1,32], index: 8, kind: input, shape index: {}]
  %s9 = inlined_call_operand.hbm [shape: bf16[32,32], index: 9, kind: input, shape index: {}]
  %s10 = inlined_call_operand.vmem [shape: bf16[1,32], index: 10, kind: input, shape index: {}]
  %s11 = inlined_call_operand.hbm [shape: bf16[32,32], index: 11, kind: input, shape index: {}]
  %s12 = inlined_call_operand.vmem [shape: bf16[1,32], index: 12, kind: input, shape index: {}]
  %s13 = inlined_call_operand.vmem [shape: bf16[32,1], index: 13, kind: input, shape index: {}]
  %s14 = inlined_call_operand.<no memory space> [shape: f32[1], index: 14, kind: input, shape index: {}]
  %s15 = inlined_call_operand.vmem [shape: f32[8,1], index: 15, kind: output, shape index: {}]
  %s16 = sld [smem:[#allocation0]]
  $region102: #{tpu_custom_call.1} parent=0
    _
  %s18 = ssub.s32 1, %s16
  %s19 = scalar_select 0, %s18, %s16
  %20 = sst [smem:[#allocation2]] %s14
  $region1: #{tpu_custom_call.1} parent=0
    #allocation3 [shape = 'u8[4096]{0}', space=vmem, size = 0x1000, scoped, tag = 'input window, operand 0, single buffered']
    #allocation4 [shape = 's32[1]{0}', space=sflag, size = 0x4, scoped, tag = 'scoped memory for tpu_custom_call.1']
    #allocation5 [shape = 'u8[4096]{0}', space=vmem, size = 0x1000, scoped, tag = 'input window, operand 1, single buffered']
    #allocation6 [shape = 's32[1]{0}', space=sflag, size = 0x4, scoped, tag = 'scoped memory for tpu_custom_call.1']
    #allocation7 [shape = 'u8[4096]{0}', space=vmem, size = 0x1000, scoped, tag = 'input window, operand 2, single buffered']
    #allocation8 [shape = 'u8[4096]{0}', space=vmem, size = 0x1000, scoped, tag = 'input window, operand 4, single buffered']
    #allocation9 [shape = 's32[1]{0}', space=sflag, size = 0x4, scoped, tag = 'scoped memory for tpu_custom_call.1']
    #allocation10 [shape = 'u8[4096]{0}', space=vmem, size = 0x1000, scoped, tag = 'input window, operand 5, single buffered']
    #allocation11 [shape = 'u8[8192]{0}', space=vmem, size = 0x2000, scoped, tag = 'input window, operand 7, single buffered']
    #allocation12 [shape = 's32[1]{0}', space=sflag, size = 0x4, scoped, tag = 'scoped memory for tpu_custom_call.1']
    #allocation13 [shape = 'u8[8192]{0}', space=vmem, size = 0x2000, scoped, tag = 'input window, operand 9, single buffered']
    #allocation14 [shape = 'u8[8192]{0}', space=vmem, size = 0x2000, scoped, tag = 'input window, operand 11, single buffered']
    #allocation15 [shape = 's32[1]{0}', space=sflag, size = 0x4, scoped, tag = 'scoped memory for tpu_custom_call.1']
    %21 = vsyncpa [#allocation4], 0
    %22 = vsyncpa [#allocation6], 0
    %23 = vsyncpa [#allocation9], 0
    %24 = vsyncpa [#allocation12], 0
    %25 = vsyncpa [#allocation15], 0
    // Predicated region
    $region2: #{tpu_custom_call.1} parent=1 // pred_check
      _
    $region3: #{tpu_custom_call.1} parent=1 // pred_check_branch
      %27 = sbr.rel (0) target = $region5
    $region4: #{tpu_custom_call.1} parent=1 // pred_region
      %29 = vsyncadd [#allocation4], 0
      %s31 = sshll.u32 %s0, 4
      %s32 = int_to_ptr.hbm [resolvable:$true] %s31
      %s33 = sshll.u32 [#allocation3], 4
      %s34 = int_to_ptr.vmem [resolvable:$true] %s33
      %36 = dma.hbm_to_vmem [thread:$0]  %s32, 128, %s34, [#allocation4]
    $region5: #{tpu_custom_call.1} parent=1 // pred_fallthru
      _
    // Predicated region
    $region6: #{tpu_custom_call.1} parent=1 // pred_check
      _
    $region7: #{tpu_custom_call.1} parent=1 // pred_check_branch
      %38 = sbr.rel (0) target = $region9
    $region8: #{tpu_custom_call.1} parent=1 // pred_region
      %40 = vsyncadd [#allocation6], 0
      %s42 = sshll.u32 %s1, 4
      %s43 = int_to_ptr.hbm [resolvable:$true] %s42
      %s44 = sshll.u32 [#allocation5], 4
      %s45 = int_to_ptr.vmem [resolvable:$true] %s44
      %47 = dma.hbm_to_vmem [thread:$0]  %s43, 128, %s45, [#allocation6]
    $region9: #{tpu_custom_call.1} parent=1 // pred_fallthru
      _
    // Predicated region
    $region10: #{tpu_custom_call.1} parent=1 // pred_check
      _
    $region11: #{tpu_custom_call.1} parent=1 // pred_check_branch
      %49 = sbr.rel (0) target = $region13
    $region12: #{tpu_custom_call.1} parent=1 // pred_region
      %51 = vsyncadd [#allocation6], 0
      %s53 = sshll.u32 %s2, 4
      %s54 = int_to_ptr.hbm [resolvable:$true] %s53
      %s55 = sshll.u32 [#allocation7], 4
      %s56 = int_to_ptr.vmem [resolvable:$true] %s55
      %58 = dma.hbm_to_vmem [thread:$0]  %s54, 128, %s56, [#allocation6]
    $region13: #{tpu_custom_call.1} parent=1 // pred_fallthru
      _
    // Predicated region
    $region14: #{tpu_custom_call.1} parent=1 // pred_check
      _
    $region15: #{tpu_custom_call.1} parent=1 // pred_check_branch
      %60 = sbr.rel (0) target = $region17
    $region16: #{tpu_custom_call.1} parent=1 // pred_region
      _
    $region17: #{tpu_custom_call.1} parent=1 // pred_fallthru
      _
    // Predicated region
    $region18: #{tpu_custom_call.1} parent=1 // pred_check
      _
    $region19: #{tpu_custom_call.1} parent=1 // pred_check_branch
      %62 = sbr.rel (0) target = $region21
    $region20: #{tpu_custom_call.1} parent=1 // pred_region
      %64 = vsyncadd [#allocation9], 0
      %s65 = sshll.u32 %s4, 4
      %s66 = int_to_ptr.hbm [resolvable:$true] %s65
      %s67 = sshll.u32 [#allocation8], 4
      %s68 = int_to_ptr.vmem [resolvable:$true] %s67
      %73 = dma.hbm_to_vmem [thread:$0]  %s66, 128, %s68, [#allocation9], 64, 64, 4
    $region21: #{tpu_custom_call.1} parent=1 // pred_fallthru
      _
    // Predicated region
    $region22: #{tpu_custom_call.1} parent=1 // pred_check
      _
    $region23: #{tpu_custom_call.1} parent=1 // pred_check_branch
      %75 = sbr.rel (0) target = $region25
    $region24: #{tpu_custom_call.1} parent=1 // pred_region
      %77 = vsyncadd [#allocation9], 0
      %s78 = sshll.u32 %s5, 4
      %s79 = int_to_ptr.hbm [resolvable:$true] %s78
      %s80 = sshll.u32 [#allocation10], 4
      %s81 = int_to_ptr.vmem [resolvable:$true] %s80
      %86 = dma.hbm_to_vmem [thread:$0]  %s79, 128, %s81, [#allocation9], 64, 64, 4
    $region25: #{tpu_custom_call.1} parent=1 // pred_fallthru
      _
    // Predicated region
    $region26: #{tpu_custom_call.1} parent=1 // pred_check
      _
    $region27: #{tpu_custom_call.1} parent=1 // pred_check_branch
      %88 = sbr.rel (0) target = $region29
    $region28: #{tpu_custom_call.1} parent=1 // pred_region
      _
    $region29: #{tpu_custom_call.1} parent=1 // pred_fallthru
      _
    // Predicated region
    $region30: #{tpu_custom_call.1} parent=1 // pred_check
      _
    $region31: #{tpu_custom_call.1} parent=1 // pred_check_branch
      %90 = sbr.rel (0) target = $region33
    $region32: #{tpu_custom_call.1} parent=1 // pred_region
      %92 = vsyncadd [#allocation12], 0
      %s93 = sshll.u32 %s7, 4
      %s94 = int_to_ptr.hbm [resolvable:$true] %s93
      %s95 = sshll.u32 [#allocation11], 4
      %s96 = int_to_ptr.vmem [resolvable:$true] %s95
      %101 = dma.hbm_to_vmem [thread:$0]  %s94, 256, %s96, [#allocation12], 64, 64, 4
    $region33: #{tpu_custom_call.1} parent=1 // pred_fallthru
      _
    // Predicated region
    $region34: #{tpu_custom_call.1} parent=1 // pred_check
      _
    $region35: #{tpu_custom_call.1} parent=1 // pred_check_branch
      %103 = sbr.rel (0) target = $region37
    $region36: #{tpu_custom_call.1} parent=1 // pred_region
      _
    $region37: #{tpu_custom_call.1} parent=1 // pred_fallthru
      _
    // Predicated region
    $region38: #{tpu_custom_call.1} parent=1 // pred_check
      _
    $region39: #{tpu_custom_call.1} parent=1 // pred_check_branch
      %105 = sbr.rel (0) target = $region41
    $region40: #{tpu_custom_call.1} parent=1 // pred_region
      %107 = vsyncadd [#allocation12], 0
      %s108 = sshll.u32 %s9, 4
      %s109 = int_to_ptr.hbm [resolvable:$true] %s108
      %s110 = sshll.u32 [#allocation13], 4
      %s111 = int_to_ptr.vmem [resolvable:$true] %s110
      %116 = dma.hbm_to_vmem [thread:$0]  %s109, 256, %s111, [#allocation12], 64, 64, 4
    $region41: #{tpu_custom_call.1} parent=1 // pred_fallthru
      _
    // Predicated region
    $region42: #{tpu_custom_call.1} parent=1 // pred_check
      _
    $region43: #{tpu_custom_call.1} parent=1 // pred_check_branch
      %118 = sbr.rel (0) target = $region45
    $region44: #{tpu_custom_call.1} parent=1 // pred_region
      _
    $region45: #{tpu_custom_call.1} parent=1 // pred_fallthru
      _
    // Predicated region
    $region46: #{tpu_custom_call.1} parent=1 // pred_check
      _
    $region47: #{tpu_custom_call.1} parent=1 // pred_check_branch
      %120 = sbr.rel (0) target = $region49
    $region48: #{tpu_custom_call.1} parent=1 // pred_region
      %122 = vsyncadd [#allocation15], 0
      %s123 = sshll.u32 %s11, 4
      %s124 = int_to_ptr.hbm [resolvable:$true] %s123
      %s125 = sshll.u32 [#allocation14], 4
      %s126 = int_to_ptr.vmem [resolvable:$true] %s125
      %131 = dma.hbm_to_vmem [thread:$0]  %s124, 256, %s126, [#allocation15], 64, 64, 4
    $region49: #{tpu_custom_call.1} parent=1 // pred_fallthru
      _
    // Predicated region
    $region50: #{tpu_custom_call.1} parent=1 // pred_check
      _
    $region51: #{tpu_custom_call.1} parent=1 // pred_check_branch
      %133 = sbr.rel (0) target = $region53
    $region52: #{tpu_custom_call.1} parent=1 // pred_region
      _
    $region53: #{tpu_custom_call.1} parent=1 // pred_fallthru
      _
    // Predicated region
    $region54: #{tpu_custom_call.1} parent=1 // pred_check
      _
    $region55: #{tpu_custom_call.1} parent=1 // pred_check_branch
      %135 = sbr.rel (0) target = $region57
    $region56: #{tpu_custom_call.1} parent=1 // pred_region
      _
    $region57: #{tpu_custom_call.1} parent=1 // pred_fallthru
      _
    // Predicated region
    $region58: #{tpu_custom_call.1} parent=1 // pred_check
      _
    $region59: #{tpu_custom_call.1} parent=1 // pred_check_branch
      %137 = sbr.rel (0) target = $region61
    $region60: #{tpu_custom_call.1} parent=1 // pred_region
      _
    $region61: #{tpu_custom_call.1} parent=1 // pred_fallthru
      _
    // Predicated region
    $region62: #{tpu_custom_call.1} parent=1 // pred_check
      _
    $region63: #{tpu_custom_call.1} parent=1 // pred_check_branch
      %139 = sbr.rel (0) target = $region65
    $region64: #{tpu_custom_call.1} parent=1 // pred_region
      %141 = dma.done [#allocation4], 128
    $region65: #{tpu_custom_call.1} parent=1 // pred_fallthru
      _
    // Predicated region
    $region66: #{tpu_custom_call.1} parent=1 // pred_check
      _
    $region67: #{tpu_custom_call.1} parent=1 // pred_check_branch
      %143 = sbr.rel (0) target = $region69
    $region68: #{tpu_custom_call.1} parent=1 // pred_region
      %145 = dma.done [#allocation6], 128
    $region69: #{tpu_custom_call.1} parent=1 // pred_fallthru
      _
    // Predicated region
    $region70: #{tpu_custom_call.1} parent=1 // pred_check
      _
    $region71: #{tpu_custom_call.1} parent=1 // pred_check_branch
      %147 = sbr.rel (0) target = $region73
    $region72: #{tpu_custom_call.1} parent=1 // pred_region
      %149 = dma.done [#allocation6], 128
    $region73: #{tpu_custom_call.1} parent=1 // pred_fallthru
      _
    // Predicated region
    $region74: #{tpu_custom_call.1} parent=1 // pred_check
      _
    $region75: #{tpu_custom_call.1} parent=1 // pred_check_branch
      %151 = sbr.rel (0) target = $region77
    $region76: #{tpu_custom_call.1} parent=1 // pred_region
      %153 = dma.done [#allocation9], 128
    $region77: #{tpu_custom_call.1} parent=1 // pred_fallthru
      _
    // Predicated region
    $region78: #{tpu_custom_call.1} parent=1 // pred_check
      _
    $region79: #{tpu_custom_call.1} parent=1 // pred_check_branch
      %155 = sbr.rel (0) target = $region81
    $region80: #{tpu_custom_call.1} parent=1 // pred_region
      %157 = dma.done [#allocation9], 128
    $region81: #{tpu_custom_call.1} parent=1 // pred_fallthru
      _
    // Predicated region
    $region82: #{tpu_custom_call.1} parent=1 // pred_check
      _
    $region83: #{tpu_custom_call.1} parent=1 // pred_check_branch
      %159 = sbr.rel (0) target = $region85
    $region84: #{tpu_custom_call.1} parent=1 // pred_region
      %161 = dma.done [#allocation12], 256
    $region85: #{tpu_custom_call.1} parent=1 // pred_fallthru
      _
    // Predicated region
    $region86: #{tpu_custom_call.1} parent=1 // pred_check
      _
    $region87: #{tpu_custom_call.1} parent=1 // pred_check_branch
      %163 = sbr.rel (0) target = $region89
    $region88: #{tpu_custom_call.1} parent=1 // pred_region
      %165 = dma.done [#allocation12], 256
    $region89: #{tpu_custom_call.1} parent=1 // pred_fallthru
      _
    // Predicated region
    $region90: #{tpu_custom_call.1} parent=1 // pred_check
      _
    $region91: #{tpu_custom_call.1} parent=1 // pred_check_branch
      %167 = sbr.rel (0) target = $region93
    $region92: #{tpu_custom_call.1} parent=1 // pred_region
      %169 = dma.done [#allocation15], 256
    $region93: #{tpu_custom_call.1} parent=1 // pred_fallthru
      _
    %v171 = vld [vmem:[#allocation3] sm:$0xff]
    %v172 = vpack.c.bf16 %v171, %v171
    %v173 = vld [vmem:[%s3] sm:$0xf]
    %v174 = vld [vmem:[%s3 + $0x4] sm:$0xf]
    %v175 = vld [vmem:[%s3 + $0x8] sm:$0xf]
    %v176 = vld [vmem:[%s3 + $0xc] sm:$0xf]
    %v177 = vld [vmem:[#allocation5] sm:$0xff]
    %v178 = vpack.c.bf16 %v177, %v177
    %v179 = vld [vmem:[#allocation8] sm:$0xf]
    %v180 = vld [vmem:[#allocation8 + $0x4] sm:$0xf]
    %v183 = vunpack.c.l.b16 %v179
    %v184 = vunpack.c.l.b16 %v180
    %v185 = vpack.c.b16 %v184, %v183
    %vm187 = vcmask 130048
    %v189 = vsel %vm187, %v178, 0
    %191 = vmatpush.bf16.msra.mxu0 0
    %192 = vmatpush.bf16.msra.mxu0 0
    %193 = vmatpush.bf16.msra.mxu0 0
    %194 = vmatpush.bf16.msra.mxu0 0
    %195 = vmatpush.bf16.msra.mxu0 0
    %196 = vmatpush.bf16.msra.mxu0 0
    %197 = vmatpush.bf16.msra.mxu0 0
    %198 = vmatpush.bf16.msra.mxu0 %v185
    %199 = vmatmul.bf16.gmra.mxu0 %v189
    %v200 = vpop.f32.mrf.mxu0
    %v201 = vadd.f32 0.0, %v200
    %v202 = vpop.f32.mrf.mxu0
    %203 = vdwg.mxu0
    %v208 = vunpack.c.l.b16 %v173
    %v209 = vunpack.c.l.b16 %v174
    %v210 = vunpack.c.l.b16 %v175
    %v211 = vunpack.c.l.b16 %v176
    %v212 = vpack.c.b16 %v209, %v208
    %v213 = vpack.c.b16 %v211, %v210
    %vm216 = vcmask 261120
    %v218 = vsel %vm216, %v172, 0
    %220 = vmatpush.bf16.msra.mxu0 0
    %221 = vmatpush.bf16.msra.mxu0 0
    %222 = vmatpush.bf16.msra.mxu0 0
    %223 = vmatpush.bf16.msra.mxu0 0
    %224 = vmatpush.bf16.msra.mxu0 0
    %225 = vmatpush.bf16.msra.mxu0 0
    %226 = vmatpush.bf16.msra.mxu0 %v213
    %227 = vmatpush.bf16.msra.mxu0 %v212
    %228 = vmatmul.bf16.gmra.mxu0 %v218
    %v229 = vpop.f32.mrf.mxu0
    %v230 = vadd.f32 %v201, %v229
    %v231 = vpop.f32.mrf.mxu0
    %232 = vdwg.mxu0
    %v233 = vld [vmem:[#allocation7] sm:$0xff]
    %v234 = vpack.c.bf16 %v233, %v233
    %v235 = vld [vmem:[#allocation10] sm:$0xf]
    %v236 = vld [vmem:[#allocation10 + $0x4] sm:$0xf]
    %v239 = vunpack.c.l.b16 %v235
    %v240 = vunpack.c.l.b16 %v236
    %v241 = vpack.c.b16 %v240, %v239
    %v244 = vsel %vm187, %v234, 0
    %246 = vmatpush.bf16.msra.mxu0 0
    %247 = vmatpush.bf16.msra.mxu0 0
    %248 = vmatpush.bf16.msra.mxu0 0
    %249 = vmatpush.bf16.msra.mxu0 0
    %250 = vmatpush.bf16.msra.mxu0 0
    %251 = vmatpush.bf16.msra.mxu0 0
    %252 = vmatpush.bf16.msra.mxu0 0
    %253 = vmatpush.bf16.msra.mxu0 %v241
    %254 = vmatmul.bf16.gmra.mxu0 %v244
    %v255 = vpop.f32.mrf.mxu0
    %v256 = vadd.f32 0.0, %v255
    %v257 = vpop.f32.mrf.mxu0
    %258 = vdwg.mxu0
    %v259 = vadd.f32 %v230, %v256
    %v260 = vpack.c.bf16 %v259, %v259
    %v261 = vld [vmem:[%s6] sm:$0x1]
    %v263 = vpack.i.b16 %v261, %v261
    %v265 = vperm.slane %v263, 0
    %v266 = vunpack.c.l.bf16 %v260
    %v267 = vunpack.c.l.bf16 %v265
    %v268 = vadd.f32 %v266, %v267
    %v269 = vpack.c.bf16 %v268, %v268
    %v270 = vunpack.c.l.bf16 %v269
    %v271 = vmax.f32 %v270, 0.0
    %v272 = vpack.c.bf16 %v271, %v271
    %v273 = vld [vmem:[#allocation11] sm:$0xf]
    %v274 = vld [vmem:[#allocation11 + $0x4] sm:$0xf]
    %v275 = vld [vmem:[#allocation11 + $0x8] sm:$0xf]
    %v276 = vld [vmem:[#allocation11 + $0xc] sm:$0xf]
    %v281 = vunpack.c.l.b16 %v273
    %v282 = vunpack.c.l.b16 %v274
    %v283 = vunpack.c.l.b16 %v275
    %v284 = vunpack.c.l.b16 %v276
    %v285 = vpack.c.b16 %v282, %v281
    %v286 = vpack.c.b16 %v284, %v283
    %v290 = vsel %vm216, %v272, 0
    %292 = vmatpush.bf16.msra.mxu0 0
    %293 = vmatpush.bf16.msra.mxu0 0
    %294 = vmatpush.bf16.msra.mxu0 0
    %295 = vmatpush.bf16.msra.mxu0 0
    %296 = vmatpush.bf16.msra.mxu0 0
    %297 = vmatpush.bf16.msra.mxu0 0
    %298 = vmatpush.bf16.msra.mxu0 %v286
    %299 = vmatpush.bf16.msra.mxu0 %v285
    %300 = vmatmul.bf16.gmra.mxu0 %v290
    %v301 = vpop.f32.mrf.mxu0
    %v302 = vadd.f32 0.0, %v301
    %v303 = vpop.f32.mrf.mxu0
    %304 = vdwg.mxu0
    %v305 = vpack.c.bf16 %v302, %v302
    %v306 = vld [vmem:[%s8] sm:$0x1]
    %v308 = vpack.i.b16 %v306, %v306
    %v310 = vperm.slane %v308, 0
    %v311 = vunpack.c.l.bf16 %v305
    %v312 = vunpack.c.l.bf16 %v310
    %v313 = vadd.f32 %v311, %v312
    %v314 = vpack.c.bf16 %v313, %v313
    %v315 = vunpack.c.l.bf16 %v314
    %v316 = vmax.f32 %v315, 0.0
    %v317 = vpack.c.bf16 %v316, %v316
    %v318 = vld [vmem:[#allocation13] sm:$0xf]
    %v319 = vld [vmem:[#allocation13 + $0x4] sm:$0xf]
    %v320 = vld [vmem:[#allocation13 + $0x8] sm:$0xf]
    %v321 = vld [vmem:[#allocation13 + $0xc] sm:$0xf]
    %v326 = vunpack.c.l.b16 %v318
    %v327 = vunpack.c.l.b16 %v319
    %v328 = vunpack.c.l.b16 %v320
    %v329 = vunpack.c.l.b16 %v321
    %v330 = vpack.c.b16 %v327, %v326
    %v331 = vpack.c.b16 %v329, %v328
    %v335 = vsel %vm216, %v317, 0
    %337 = vmatpush.bf16.msra.mxu0 0
    %338 = vmatpush.bf16.msra.mxu0 0
    %339 = vmatpush.bf16.msra.mxu0 0
    %340 = vmatpush.bf16.msra.mxu0 0
    %341 = vmatpush.bf16.msra.mxu0 0
    %342 = vmatpush.bf16.msra.mxu0 0
    %343 = vmatpush.bf16.msra.mxu0 %v331
    %344 = vmatpush.bf16.msra.mxu0 %v330
    %345 = vmatmul.bf16.gmra.mxu0 %v335
    %v346 = vpop.f32.mrf.mxu0
    %v347 = vadd.f32 0.0, %v346
    %v348 = vpop.f32.mrf.mxu0
    %349 = vdwg.mxu0
    %v350 = vpack.c.bf16 %v347, %v347
    %v351 = vld [vmem:[%s10] sm:$0x1]
    %v353 = vpack.i.b16 %v351, %v351
    %v355 = vperm.slane %v353, 0
    %v356 = vunpack.c.l.bf16 %v350
    %v357 = vunpack.c.l.bf16 %v355
    %v358 = vadd.f32 %v356, %v357
    %v359 = vpack.c.bf16 %v358, %v358
    %v360 = vunpack.c.l.bf16 %v359
    %v361 = vmax.f32 %v360, 0.0
    %v362 = vpack.c.bf16 %v361, %v361
    %v363 = vld [vmem:[#allocation14] sm:$0xf]
    %v364 = vld [vmem:[#allocation14 + $0x4] sm:$0xf]
    %v365 = vld [vmem:[#allocation14 + $0x8] sm:$0xf]
    %v366 = vld [vmem:[#allocation14 + $0xc] sm:$0xf]
    %v371 = vunpack.c.l.b16 %v363
    %v372 = vunpack.c.l.b16 %v364
    %v373 = vunpack.c.l.b16 %v365
    %v374 = vunpack.c.l.b16 %v366
    %v375 = vpack.c.b16 %v372, %v371
    %v376 = vpack.c.b16 %v374, %v373
    %v380 = vsel %vm216, %v362, 0
    %382 = vmatpush.bf16.msra.mxu0 0
    %383 = vmatpush.bf16.msra.mxu0 0
    %384 = vmatpush.bf16.msra.mxu0 0
    %385 = vmatpush.bf16.msra.mxu0 0
    %386 = vmatpush.bf16.msra.mxu0 0
    %387 = vmatpush.bf16.msra.mxu0 0
    %388 = vmatpush.bf16.msra.mxu0 %v376
    %389 = vmatpush.bf16.msra.mxu0 %v375
    %390 = vmatmul.bf16.gmra.mxu0 %v380
    %v391 = vpop.f32.mrf.mxu0
    %v392 = vadd.f32 0.0, %v391
    %v393 = vpop.f32.mrf.mxu0
    %394 = vdwg.mxu0
    %v395 = vpack.c.bf16 %v392, %v392
    %v396 = vld [vmem:[%s12] sm:$0x1]
    %v398 = vpack.i.b16 %v396, %v396
    %v400 = vperm.slane %v398, 0
    %v401 = vunpack.c.l.bf16 %v395
    %v402 = vunpack.c.l.bf16 %v400
    %v403 = vadd.f32 %v401, %v402
    %v404 = vpack.c.bf16 %v403, %v403
    %v405 = vunpack.c.l.bf16 %v404
    %v406 = vmax.f32 %v405, 0.0
    %v407 = vpack.c.bf16 %v406, %v406
    %v408 = vld [vmem:[%s13] sm:$0xf]
    %v409 = vld [vmem:[%s13 + $0x4] sm:$0xf]
    %v410 = vld [vmem:[%s13 + $0x8] sm:$0xf]
    %v411 = vld [vmem:[%s13 + $0xc] sm:$0xf]
    %s412 = sld [smem:[#allocation2]]
    %v413 = vstv %s412
    %v418 = vunpack.c.l.b16 %v408
    %v419 = vunpack.c.l.b16 %v409
    %v420 = vunpack.c.l.b16 %v410
    %v421 = vunpack.c.l.b16 %v411
    %v422 = vpack.c.b16 %v419, %v418
    %v423 = vpack.c.b16 %v421, %v420
    %v427 = vsel %vm216, %v407, 0
    %429 = vmatpush.bf16.msra.mxu0 0
    %430 = vmatpush.bf16.msra.mxu0 0
    %431 = vmatpush.bf16.msra.mxu0 0
    %432 = vmatpush.bf16.msra.mxu0 0
    %433 = vmatpush.bf16.msra.mxu0 0
    %434 = vmatpush.bf16.msra.mxu0 0
    %435 = vmatpush.bf16.msra.mxu0 %v423
    %436 = vmatpush.bf16.msra.mxu0 %v422
    %437 = vmatmul.bf16.gmra.mxu0 %v427
    %v438 = vpop.f32.mrf.mxu0
    %v439 = vadd.f32 %v413, %v438
    %v440 = vpop.f32.mrf.mxu0
    %441 = vdwg.mxu0
    %vm442 = vcmask 7168
    %443 = vst.msk [vmem:[%s15] sm:$0xff] %vm442, %v439
    // Predicated region
    $region94: #{tpu_custom_call.1} parent=1 // pred_check
      _
    $region95: #{tpu_custom_call.1} parent=1 // pred_check_branch
      %445 = sbr.rel (0) target = $region97
    $region96: #{tpu_custom_call.1} parent=1 // pred_region
      _
    $region97: #{tpu_custom_call.1} parent=1 // pred_fallthru
      _
    // Predicated region
    $region98: #{tpu_custom_call.1} parent=1 // pred_check
      _
    $region99: #{tpu_custom_call.1} parent=1 // pred_check_branch
      %447 = sbr.rel (0) target = $region101
    $region100: #{tpu_custom_call.1} parent=1 // pred_region
      _
    $region101: #{tpu_custom_call.1} parent=1 // pred_fallthru
      _
    %448 = vsyncpa [#allocation4], 1
    %449 = vsyncpa [#allocation6], 1
    %450 = vsyncpa [#allocation9], 1
    %451 = vsyncpa [#allocation12], 1
    %452 = vsyncpa [#allocation15], 1

</llo_original>
